<compile_context>
chip_gen: v5e
topology: v5e:2x2
jax: 0.10.0
libtpu: 0.0.40
codegen_flags: <defaults>
</compile_context>

<pallas_src>
import math

import jax
import jax.numpy as jnp
from jax.experimental import pallas as pl
from jax.experimental.pallas import tpu as pltpu


def _drop_path_kernel(keep_ref, x_ref, o_ref):
    # keep_ref: (TN, 1) per-sample scale (0.0 for dropped, 1/keep_prob or 1.0
    #           for kept); broadcasts across the lane (feature) axis.
    # x_ref / o_ref: (TN, TF) tiles of the flattened activation.
    o_ref[...] = x_ref[...] * keep_ref[...]


def _largest_divisor_tile(total, gran, cap):
    """Largest t such that gran | t, t | total and t <= cap (best effort).

    Returns None if `gran` does not divide `total`.  Always returns at least
    `gran` when it does (even if gran > cap), since gran is the minimum legal
    tile anyway.
    """
    if total % gran != 0:
        return None
    q = total // gran
    kmax = max(1, min(q, cap // gran))
    for k in range(kmax, 0, -1):
        if q % k == 0:
            return k * gran
    return gran


def _vmem_capacity_bytes():
    try:
        return int(pltpu.get_tpu_info().vmem_capacity_bytes)
    except Exception:
        return 64 << 20  # conservative: v7x per-TensorCore VMEM


def _pick_tiles(n, f, dtype):
    """Choose (TN, TF, vmem_limit) with lane-dense divisor tiles <= ~4 MiB."""
    itemsize = jnp.dtype(dtype).itemsize
    # Packed-sublane granularity: 8 rows f32, 16 bf16/f16, 32 int8/fp8.
    sub = max(8, 32 // itemsize)

    vmem = _vmem_capacity_bytes()
    # ~4 MiB per tile on 128 MiB chips, automatically smaller on tight-VMEM
    # generations.  Double-buffered in+out at 4 MiB => ~16 MiB of VMEM.
    budget = min(4 << 20, max(1 << 20, vmem // 16))
    # Explicit scoped-VMEM limit (scoped defaults: 16 MiB v5e / 32 MiB v6e,v7x).
    vmem_limit = int(min(64 << 20, max(32 << 20, vmem // 2)))

    # Lane (feature) tile: largest multiple of 128 dividing f that fits the
    # budget even at minimum height.  If f is not a multiple of 128 the only
    # always-legal block is the full dim.
    if f % 128 == 0:
        tf = _largest_divisor_tile(f, 128, max(128, budget // (sub * itemsize)))
    else:
        tf = f

    # Sublane (batch) tile: as many rows as fit the budget; full N if possible,
    # otherwise a divisor of N aligned to the packed-row granularity.
    rows_cap = max(1, budget // (tf * itemsize))
    if rows_cap >= n:
        tn = n
    else:
        tn = _largest_divisor_tile(n, sub, rows_cap)
        if tn is None:
            # n not a multiple of the sublane granularity: fall back to a
            # ragged edge along the (cheap) sublane axis; lanes stay dense.
            tn = max(sub, (rows_cap // sub) * sub)
    return tn, tf, vmem_limit


def drop_path_pallas(x, key, drop_prob=0.0, training=False, scale_by_keep=True,
                     donate_x=False):
    """Pallas DropPath.  `x` has batch as its leading dim (e.g. NCHW).

    `key` must be a fresh jax.random key (or int seed) per call/layer when
    training with drop_prob > 0 — reusing a key gives correlated drop patterns.
    """
    if drop_prob == 0.0 or not training:
        return x
    keep_prob = 1.0 - drop_prob

    if key is None:
        raise ValueError("drop_path_pallas requires a PRNG key when training "
                         "with drop_prob > 0.")
    if isinstance(key, int):
        key = jax.random.PRNGKey(key)

    n = x.shape[0]
    f = math.prod(x.shape[1:])
    x2 = x.reshape(n, f)

    # Per-sample Bernoulli(keep_prob) scale, computed in f32, cast once.
    keep = jax.random.bernoulli(key, p=keep_prob, shape=(n,)).astype(jnp.float32)
    if scale_by_keep and keep_prob > 0.0:
        keep = keep / jnp.float32(keep_prob)
    keep2 = keep.astype(x.dtype).reshape(n, 1)

    tn, tf, vmem_limit = _pick_tiles(n, f, x.dtype)
    grid = (pl.cdiv(n, tn), pl.cdiv(f, tf))  # j (features) innermost

    itemsize = jnp.dtype(x.dtype).itemsize
    cost = pl.CostEstimate(
        flops=n * f,
        bytes_accessed=2 * n * f * itemsize + n * itemsize,
        transcendentals=0,
    )

    extra_kwargs = {}
    if donate_x:
        # Alias the activation input (arg index 1) onto the output buffer.
        extra_kwargs["input_output_aliases"] = {1: 0}

    out = pl.pallas_call(
        _drop_path_kernel,
        out_shape=jax.ShapeDtypeStruct((n, f), x.dtype),
        grid=grid,
        in_specs=[
            # Same (TN, 1) keep block for every feature tile j of a sample;
            # constant block index across the innermost axis => DMA'd once.
            pl.BlockSpec((tn, 1), lambda i, j: (i, 0)),
            pl.BlockSpec((tn, tf), lambda i, j: (i, j)),
        ],
        out_specs=pl.BlockSpec((tn, tf), lambda i, j: (i, j)),
        compiler_params=pltpu.CompilerParams(
            dimension_semantics=("parallel", "parallel"),
            vmem_limit_bytes=vmem_limit,
        ),
        cost_estimate=cost,
        **extra_kwargs,
    )(keep2, x2)

    return out.reshape(x.shape)


class DropPath:
    """JAX/Pallas mirror of the PyTorch DropPath module."""

    def __init__(self, drop_prob: float = 0.0, scale_by_keep: bool = True):
        self.drop_prob = drop_prob
        self.scale_by_keep = scale_by_keep
        self.training = True

    def __call__(self, x, key=None):
        return drop_path_pallas(x, key, self.drop_prob, self.training,
                                self.scale_by_keep)


if __name__ == "__main__":
    root = jax.random.PRNGKey(0)
    k_data, k_drop, k_bf16 = jax.random.split(root, 3)

    # Small NCHW input: batch=2, channels=4, spatial=16x16 (F = 1024, lane-aligned).
    x = jax.random.normal(k_data, (2, 4, 16, 16), dtype=jnp.float32)

    # Eval / drop_prob=0 path: identity.
    mod_eval = DropPath(drop_prob=0.25, scale_by_keep=True)
    mod_eval.training = False
    y_eval = jax.block_until_ready(mod_eval(x, key=k_drop))
    assert jnp.allclose(y_eval, x), "eval path should be identity"

    # Training path with drop_prob > 0: per-sample rows are either all-zero
    # or x scaled by 1/keep_prob.
    mod = DropPath(drop_prob=0.25, scale_by_keep=True)
    mod.training = True
    y = jax.block_until_ready(mod(x, key=k_drop))

    keep_prob = 1.0 - 0.25
    xf = x.reshape(x.shape[0], -1)
    yf = y.reshape(y.shape[0], -1)
    for b in range(x.shape[0]):
        row_zero = bool(jnp.max(jnp.abs(yf[b])) == 0.0)
        row_scaled = bool(jnp.allclose(yf[b], xf[b] / keep_prob, atol=1e-5))
        assert row_zero or row_scaled, f"sample {b}: not dropped nor scaled-kept"

    # bf16 smoke test with a non-128-multiple feature size (full-dim lane tile,
    # 16-row sublane granularity path).
    xb = jax.random.normal(k_data, (16, 3, 8, 8), dtype=jnp.bfloat16)
    yb = jax.block_until_ready(
        drop_path_pallas(xb, k_bf16, drop_prob=0.5, training=True,
                         scale_by_keep=True))
    xbf = xb.astype(jnp.float32).reshape(16, -1)
    ybf = yb.astype(jnp.float32).reshape(16, -1)
    for b in range(16):
        row_zero = bool(jnp.max(jnp.abs(ybf[b])) == 0.0)
        row_scaled = bool(jnp.allclose(ybf[b], xbf[b] / 0.5, rtol=2e-2, atol=2e-2))
        assert row_zero or row_scaled, f"bf16 sample {b}: not dropped nor scaled-kept"

    print("KERNEL_OK")
</pallas_src>

<mosaic_0001>
module attributes {stable_mosaic.version = 11 : i64} {
  func.func @_drop_path_kernel(%arg0: i32, %arg1: i32, %arg2: memref<2x1xf32, #tpu.memory_space<vmem>>, %arg3: memref<2x1024xf32, #tpu.memory_space<vmem>>, %arg4: memref<2x1024xf32, #tpu.memory_space<vmem>>) attributes {dimension_semantics = [#tpu.dimension_semantics<parallel>, #tpu.dimension_semantics<parallel>], iteration_bounds = array<i64: 1, 1>, scalar_prefetch = 0 : i64, scratch_operands = 0 : i64, tpu.core_type = #tpu.core_type<tc>, window_params = [{transform_indices = @transform_0, window_bounds = array<i64: 2, 1>}, {transform_indices = @transform_1, window_bounds = array<i64: 2, 1024>}, {transform_indices = @transform_2, window_bounds = array<i64: 2, 1024>}]} {
    %c0 = arith.constant 0 : index
    %c0_0 = arith.constant 0 : index
    %0 = vector.load %arg3[%c0, %c0_0] : memref<2x1024xf32, #tpu.memory_space<vmem>>, vector<2x1024xf32>
    %c0_1 = arith.constant 0 : index
    %c0_2 = arith.constant 0 : index
    %1 = vector.load %arg2[%c0_1, %c0_2] : memref<2x1xf32, #tpu.memory_space<vmem>>, vector<2x1xf32>
    %2 = vector.broadcast %1 : vector<2x1xf32> to vector<2x1024xf32>
    %3 = arith.mulf %0, %2 : vector<2x1024xf32>
    %c0_3 = arith.constant 0 : index
    %c0_4 = arith.constant 0 : index
    %4 = vector.load %arg4[%c0_3, %c0_4] : memref<2x1024xf32, #tpu.memory_space<vmem>>, vector<2x1024xf32>
    tpu.vector_store %arg4[%c0_3, %c0_4], %3 {strides = array<i32>} : memref<2x1024xf32, #tpu.memory_space<vmem>>, vector<2x1024xf32>,
    return
  }
  func.func @transform_0(%arg0: i32, %arg1: i32) -> (i32, i32) {
    %c0_i32 = arith.constant 0 : i32
    %c0_i32_0 = arith.constant 0 : i32
    return %arg0, %c0_i32 : i32, i32
  }
  func.func @transform_1(%arg0: i32, %arg1: i32) -> (i32, i32) {
    %c0_i32 = arith.constant 0 : i32
    return %arg0, %arg1 : i32, i32
  }
  func.func @transform_2(%arg0: i32, %arg1: i32) -> (i32, i32) {
    %c0_i32 = arith.constant 0 : i32
    return %arg0, %arg1 : i32, i32
  }
}

</mosaic_0001>

<llo_original>
// kernel: tpu_custom_call.1
$region0: #{tpu_custom_call.1}
  #allocation0 [shape = 'u32[]', space=smem, size = 0x4, offset = 0x4, fixed_abs, tag = 'smem constant byte address 0x4 - core index']
  #allocation1 [shape = 'u32[72,128]{1,0:T(1,128)}', space=vmem, size = 0x9000, scoped, tag = 'internal scratch']
  %s0 = inlined_call_operand.vmem [shape: f32[2,1], index: 0, kind: input, shape index: {}]
  %s1 = inlined_call_operand.hbm [shape: f32[2,1024], index: 1, kind: input, shape index: {}]
  %s2 = inlined_call_operand.hbm [shape: f32[2,1024], index: 2, kind: output, shape index: {}]
  %s3 = sld [smem:[#allocation0]]
  $region22: #{tpu_custom_call.1} parent=0
    _
  %s5 = ssub.s32 1, %s3
  %s6 = scalar_select 0, %s5, %s3
  $region1: #{tpu_custom_call.1} parent=0
    #allocation2 [shape = 'u8[8192]{0}', space=vmem, size = 0x2000, scoped, tag = 'input window, operand 1, single buffered']
    #allocation3 [shape = 's32[1]{0}', space=sflag, size = 0x4, scoped, tag = 'scoped memory for tpu_custom_call.1']
    #allocation4 [shape = 's32[1]{0}', space=sflag, size = 0x4, scoped, tag = 'scoped memory for tpu_custom_call.1']
    #allocation5 [shape = 'u8[8192]{0}', space=vmem, size = 0x2000, scoped, tag = 'output window, operand 0, single buffered']
    %7 = vsyncpa [#allocation3], 0
    %8 = vsyncpa [#allocation4], 0
    // Predicated region
    $region2: #{tpu_custom_call.1} parent=1 // pred_check
      _
    $region3: #{tpu_custom_call.1} parent=1 // pred_check_branch
      %10 = sbr.rel (0) target = $region5
    $region4: #{tpu_custom_call.1} parent=1 // pred_region
      _
    $region5: #{tpu_custom_call.1} parent=1 // pred_fallthru
      _
    // Predicated region
    $region6: #{tpu_custom_call.1} parent=1 // pred_check
      _
    $region7: #{tpu_custom_call.1} parent=1 // pred_check_branch
      %12 = sbr.rel (0) target = $region9
    $region8: #{tpu_custom_call.1} parent=1 // pred_region
      %14 = vsyncadd [#allocation3], 0
      %s16 = sshll.u32 %s1, 4
      %s17 = int_to_ptr.hbm [resolvable:$true] %s16
      %s18 = sshll.u32 [#allocation2], 4
      %s19 = int_to_ptr.vmem [resolvable:$true] %s18
      %21 = dma.hbm_to_vmem [thread:$0]  %s17, 256, %s19, [#allocation3]
    $region9: #{tpu_custom_call.1} parent=1 // pred_fallthru
      _
    // Predicated region
    $region10: #{tpu_custom_call.1} parent=1 // pred_check
      _
    $region11: #{tpu_custom_call.1} parent=1 // pred_check_branch
      %23 = sbr.rel (0) target = $region13
    $region12: #{tpu_custom_call.1} parent=1 // pred_region
      %25 = dma.done [#allocation3], 256
    $region13: #{tpu_custom_call.1} parent=1 // pred_fallthru
      _
    %v26 = vld [vmem:[#allocation2] sm:$0xff]
    %v27 = vld [vmem:[#allocation2 + $0x8] sm:$0xff]
    %v28 = vld [vmem:[%s0] sm:$0x3]
    %30 = vset.pattern.permute.xlu0 0
    %31 = vperm.xlu0 %30, %v28
    %v32 = vpop.permute.xlu0 %31
    %v34 = vunpack.c.l.s4 269488144
    %v35 = vunpack.c.0.s8 %v34
    %v36 = vperm.slane %v32, %v35
    %v38 = vmul.f32 %v26, %v36
    %v39 = vmul.f32 %v27, %v36
    %40 = vst [vmem:[#allocation5] sm:$0xff] %v38
    %41 = vst [vmem:[#allocation5 + $0x8] sm:$0xff] %v39
    // Predicated region
    $region14: #{tpu_custom_call.1} parent=1 // pred_check
      _
    $region15: #{tpu_custom_call.1} parent=1 // pred_check_branch
      %43 = sbr.rel (0) target = $region17
    $region16: #{tpu_custom_call.1} parent=1 // pred_region
      %45 = vsyncadd [#allocation4], 0
      %s47 = sshll.u32 [#allocation5], 4
      %s48 = int_to_ptr.vmem [resolvable:$true] %s47
      %s49 = sshll.u32 %s2, 4
      %s50 = int_to_ptr.hbm [resolvable:$true] %s49
      %52 = dma.vmem_to_hbm [thread:$0]  %s48, 256, %s50, [#allocation4]
    $region17: #{tpu_custom_call.1} parent=1 // pred_fallthru
      _
    // Predicated region
    $region18: #{tpu_custom_call.1} parent=1 // pred_check
      _
    $region19: #{tpu_custom_call.1} parent=1 // pred_check_branch
      %54 = sbr.rel (0) target = $region21
    $region20: #{tpu_custom_call.1} parent=1 // pred_region
      %56 = dma.done [#allocation4], 256
    $region21: #{tpu_custom_call.1} parent=1 // pred_fallthru
      _
    %57 = vsyncpa [#allocation3], 1
    %58 = vsyncpa [#allocation4], 1

</llo_original>
